<compile_context>
chip_gen: v5e
topology: v5e:2x2
jax: 0.10.0
libtpu: 0.0.40
codegen_flags: <defaults>
</compile_context>

<pallas_src>
import functools

import jax
import jax.numpy as jnp
from jax import lax
from jax.experimental import pallas as pl
from jax.experimental.pallas import tpu as pltpu


def _round_up(x, m):
    return ((x + m - 1) // m) * m


def _pairlist_kernel(pos_i_ref, posT_j_ref, sub_i_ref, sub_j_ref, dm_ref,
                     *, cutoff_sq, n_atoms, tile_i, tile_j):
    # pos_i_ref : [TI, 3] f32  (atoms on sublanes)
    # posT_j_ref: [3, TJ] f32  (atoms on lanes)
    # sub_i_ref : [TI, 1] i32, sub_j_ref: [1, TJ] i32
    # dm_ref    : [TI, TJ] f32  -> d_ij for valid pairs, -1.0 sentinel otherwise
    bi = pl.program_id(0)
    bj = pl.program_id(1)

    # A tile is entirely strictly below the diagonal (every gi > gj) iff its
    # smallest row index exceeds its largest column index.
    below_diag = bi * tile_i >= (bj + 1) * tile_j

    @pl.when(below_diag)
    def _():
        dm_ref[...] = jnp.full((tile_i, tile_j), -1.0, dtype=jnp.float32)

    @pl.when(jnp.logical_not(below_diag))
    def _():
        p_i = pos_i_ref[...]            # [TI, 3]
        p_j = posT_j_ref[...]           # [3, TJ]

        # Per-component squared-distance accumulation (pure VPU broadcasts).
        d2 = jnp.zeros((tile_i, tile_j), jnp.float32)
        for k in range(3):
            dk = p_i[:, k:k + 1] - p_j[k:k + 1, :]      # [TI,1] - [1,TJ] -> [TI,TJ]
            d2 = d2 + dk * dk

        gi = bi * tile_i + lax.broadcasted_iota(jnp.int32, (tile_i, tile_j), 0)
        gj = bj * tile_j + lax.broadcasted_iota(jnp.int32, (tile_i, tile_j), 1)
        same = sub_i_ref[...] == sub_j_ref[...]          # [TI,TJ] same-subsystem
        valid = ((gi < gj) & same & (d2 <= cutoff_sq)
                 & (gi < n_atoms) & (gj < n_atoms))      # i<j, within cutoff, no padding
        dm_ref[...] = jnp.where(valid, jnp.sqrt(d2), -1.0)


def pairlist_forward(positions, atomic_subsystem_indices, cutoff=5.0,
                     max_pairs=None, tile_i=256, tile_j=256):
    """positions: [nr_atoms, 3] f32, atomic_subsystem_indices: [nr_atoms] int."""
    n = positions.shape[0]
    positions = positions.astype(jnp.float32)
    sub = atomic_subsystem_indices.astype(jnp.int32)

    # Tile sizes clamped for small inputs; TI multiple of 8, TJ multiple of 128.
    ti = min(int(tile_i), _round_up(n, 8))
    tj = min(int(tile_j), _round_up(n, 128))
    npi = _round_up(n, ti)
    npj = _round_up(n, tj)

    pos_i = jnp.pad(positions, ((0, npi - n), (0, 0)))                 # [npi, 3]
    posT_j = jnp.pad(positions, ((0, npj - n), (0, 0))).T              # [3, npj]
    sub_i = jnp.pad(sub, (0, npi - n), constant_values=-1).reshape(npi, 1)
    sub_j = jnp.pad(sub, (0, npj - n), constant_values=-2).reshape(1, npj)

    kernel = functools.partial(_pairlist_kernel, cutoff_sq=float(cutoff) ** 2,
                               n_atoms=n, tile_i=ti, tile_j=tj)
    d_masked = pl.pallas_call(
        kernel,
        out_shape=jax.ShapeDtypeStruct((npi, npj), jnp.float32),
        grid=(npi // ti, npj // tj),
        in_specs=[
            pl.BlockSpec((ti, 3), lambda i, j: (i, 0)),    # pos_i (whole xyz resident)
            pl.BlockSpec((3, tj), lambda i, j: (0, j)),    # posT_j
            pl.BlockSpec((ti, 1), lambda i, j: (i, 0)),    # subsystem (column)
            pl.BlockSpec((1, tj), lambda i, j: (0, j)),    # subsystem (row)
        ],
        out_specs=pl.BlockSpec((ti, tj), lambda i, j: (i, j)),
        compiler_params=pltpu.CompilerParams(
            dimension_semantics=("parallel", "parallel")),
    )(pos_i, posT_j, sub_i, sub_j)

    d_masked = d_masked[:n, :n]
    valid = d_masked >= 0.0

    # TODO(synk): torch returns dynamically-sized [2, n_pairs]; JAX requires a static
    # bound, so outputs are padded to max_pairs; `n_pairs` / `pair_mask` mark validity.
    if max_pairs is None:
        max_pairs = max(n * (n - 1) // 2, 1)
    idx_i, idx_j = jnp.nonzero(valid, size=max_pairs, fill_value=0)
    pair_indices = jnp.stack([idx_i, idx_j], axis=0)       # [2, max_pairs]
    n_pairs = jnp.sum(valid.astype(jnp.int32))
    pair_mask = jnp.arange(max_pairs) < n_pairs

    # r_ij recomputed from the tiny [N,3] positions array (no dense [3,N,N] output).
    r_ij = jnp.where(pair_mask[:, None],
                     positions[idx_i] - positions[idx_j], 0.0)   # [max_pairs, 3]
    d_ij = jnp.where(pair_mask, d_masked[idx_i, idx_j], 0.0)     # [max_pairs]

    return {
        "pair_indices": pair_indices,
        "d_ij": d_ij,
        "r_ij": r_ij,
        "n_pairs": n_pairs,
        "pair_mask": pair_mask,
    }


def _reference(positions, sub, cutoff):
    n = positions.shape[0]
    diff = positions[:, None, :] - positions[None, :, :]
    d = jnp.sqrt(jnp.sum(diff * diff, axis=-1))
    idx = jnp.arange(n)
    mask = ((idx[:, None] < idx[None, :])
            & (sub[:, None] == sub[None, :])
            & (d <= cutoff))
    return d, mask


def _check(positions, sub, cutoff, out):
    d_ref, mask_ref = _reference(positions, sub, cutoff)
    max_pairs = out["pair_indices"].shape[1]
    ri, rj = jnp.nonzero(mask_ref, size=max_pairs, fill_value=0)
    n_ref = int(jnp.sum(mask_ref))
    assert int(out["n_pairs"]) == n_ref
    k = n_ref
    assert bool(jnp.all(out["pair_indices"][0, :k] == ri[:k]))
    assert bool(jnp.all(out["pair_indices"][1, :k] == rj[:k]))
    assert jnp.allclose(out["d_ij"][:k], d_ref[ri[:k], rj[:k]], atol=1e-5)
    assert jnp.allclose(out["r_ij"][:k],
                        positions[ri[:k]] - positions[rj[:k]], atol=1e-5)
    # padded tail must be zeroed / masked
    assert bool(jnp.all(~out["pair_mask"][k:]))
    assert jnp.allclose(out["d_ij"][k:], 0.0)


if __name__ == "__main__":
    key = jax.random.PRNGKey(0)
    cutoff = 5.0
    k1, k2 = jax.random.split(key)

    # Small case: 8 atoms, two subsystems of 4, spread so some pairs exceed the cutoff.
    n_atoms = 8
    positions = jax.random.uniform(k1, (n_atoms, 3), dtype=jnp.float32,
                                   minval=0.0, maxval=8.0)
    atomic_subsystem_indices = jnp.array([0, 0, 0, 0, 1, 1, 1, 1], dtype=jnp.int32)
    out = pairlist_forward(positions, atomic_subsystem_indices, cutoff)
    jax.block_until_ready(out)
    _check(positions, atomic_subsystem_indices, cutoff, out)

    # Medium case: exercises a multi-tile grid, triangular tile skip and padding.
    n2 = 200
    pos2 = jax.random.uniform(k2, (n2, 3), dtype=jnp.float32, minval=0.0, maxval=12.0)
    sub2 = (jnp.arange(n2) // 50).astype(jnp.int32)          # 4 subsystems of 50 atoms
    out2 = pairlist_forward(pos2, sub2, cutoff, tile_i=64, tile_j=128)
    jax.block_until_ready(out2)
    _check(pos2, sub2, cutoff, out2)

    print("KERNEL_OK")
</pallas_src>

<mosaic_0001>
module attributes {stable_mosaic.version = 11 : i64} {
  func.func @_pairlist_kernel(%arg0: i32, %arg1: i32, %arg2: memref<8x3xf32, #tpu.memory_space<vmem>>, %arg3: memref<3x128xf32, #tpu.memory_space<vmem>>, %arg4: memref<8x1xi32, #tpu.memory_space<vmem>>, %arg5: memref<1x128xi32, #tpu.memory_space<vmem>>, %arg6: memref<8x128xf32, #tpu.memory_space<vmem>>) attributes {dimension_semantics = [#tpu.dimension_semantics<parallel>, #tpu.dimension_semantics<parallel>], iteration_bounds = array<i64: 1, 1>, scalar_prefetch = 0 : i64, scratch_operands = 0 : i64, tpu.core_type = #tpu.core_type<tc>, window_params = [{transform_indices = @transform_0, window_bounds = array<i64: 8, 3>}, {transform_indices = @transform_1, window_bounds = array<i64: 3, 128>}, {transform_indices = @transform_2, window_bounds = array<i64: 8, 1>}, {transform_indices = @transform_3, window_bounds = array<i64: 1, 128>}, {transform_indices = @transform_4, window_bounds = array<i64: 8, 128>}]} {
    %c8_i32 = arith.constant 8 : i32
    %0 = arith.muli %arg0, %c8_i32 : i32
    %c1_i32 = arith.constant 1 : i32
    %1 = arith.addi %arg1, %c1_i32 : i32
    %c128_i32 = arith.constant 128 : i32
    %2 = arith.muli %1, %c128_i32 : i32
    %3 = arith.cmpi sge, %0, %2 : i32
    %4 = arith.extui %3 : i1 to i32
    %c0_i32 = arith.constant 0 : i32
    %5 = arith.cmpi ne, %4, %c0_i32 : i32
    scf.if %5 {
      %cst = arith.constant -1.000000e+00 : f32
      %9 = vector.broadcast %cst : f32 to vector<8x128xf32>
      %c0 = arith.constant 0 : index
      %c0_1 = arith.constant 0 : index
      %10 = vector.load %arg6[%c0, %c0_1] : memref<8x128xf32, #tpu.memory_space<vmem>>, vector<8x128xf32>
      tpu.vector_store %arg6[%c0, %c0_1], %9 {strides = array<i32>} : memref<8x128xf32, #tpu.memory_space<vmem>>, vector<8x128xf32>,
    } else {
    }
    %true = arith.constant true
    %6 = arith.xori %3, %true : i1
    %7 = arith.extui %6 : i1 to i32
    %c0_i32_0 = arith.constant 0 : i32
    %8 = arith.cmpi ne, %7, %c0_i32_0 : i32
    scf.if %8 {
      %c0 = arith.constant 0 : index
      %c0_1 = arith.constant 0 : index
      %9 = vector.load %arg2[%c0, %c0_1] : memref<8x3xf32, #tpu.memory_space<vmem>>, vector<8x3xf32>
      %c0_2 = arith.constant 0 : index
      %c0_3 = arith.constant 0 : index
      %10 = vector.load %arg3[%c0_2, %c0_3] : memref<3x128xf32, #tpu.memory_space<vmem>>, vector<3x128xf32>
      %cst = arith.constant 0.000000e+00 : f32
      %11 = vector.broadcast %cst : f32 to vector<8x128xf32>
      %12 = vector.extract_strided_slice %9 {offsets = [0, 0], sizes = [8, 1], strides = [1, 1]} : vector<8x3xf32> to vector<8x1xf32>
      %13 = vector.extract_strided_slice %10 {offsets = [0, 0], sizes = [1, 128], strides = [1, 1]} : vector<3x128xf32> to vector<1x128xf32>
      %14 = vector.broadcast %12 : vector<8x1xf32> to vector<8x128xf32>
      %15 = vector.broadcast %13 : vector<1x128xf32> to vector<8x128xf32>
      %16 = arith.subf %14, %15 : vector<8x128xf32>
      %17 = arith.mulf %16, %16 : vector<8x128xf32>
      %18 = arith.addf %11, %17 : vector<8x128xf32>
      %19 = vector.extract_strided_slice %9 {offsets = [0, 1], sizes = [8, 1], strides = [1, 1]} : vector<8x3xf32> to vector<8x1xf32>
      %20 = vector.extract_strided_slice %10 {offsets = [1, 0], sizes = [1, 128], strides = [1, 1]} : vector<3x128xf32> to vector<1x128xf32>
      %21 = vector.broadcast %19 : vector<8x1xf32> to vector<8x128xf32>
      %22 = vector.broadcast %20 : vector<1x128xf32> to vector<8x128xf32>
      %23 = arith.subf %21, %22 : vector<8x128xf32>
      %24 = arith.mulf %23, %23 : vector<8x128xf32>
      %25 = arith.addf %18, %24 : vector<8x128xf32>
      %26 = vector.extract_strided_slice %9 {offsets = [0, 2], sizes = [8, 1], strides = [1, 1]} : vector<8x3xf32> to vector<8x1xf32>
      %27 = vector.extract_strided_slice %10 {offsets = [2, 0], sizes = [1, 128], strides = [1, 1]} : vector<3x128xf32> to vector<1x128xf32>
      %28 = vector.broadcast %26 : vector<8x1xf32> to vector<8x128xf32>
      %29 = vector.broadcast %27 : vector<1x128xf32> to vector<8x128xf32>
      %30 = arith.subf %28, %29 : vector<8x128xf32>
      %31 = arith.mulf %30, %30 : vector<8x128xf32>
      %32 = arith.addf %25, %31 : vector<8x128xf32>
      %c8_i32_4 = arith.constant 8 : i32
      %33 = arith.muli %arg0, %c8_i32_4 : i32
      %34 = tpu.iota {dimensions = array<i32: 0>} : vector<8x128xi32>
      %35 = vector.broadcast %33 : i32 to vector<8x128xi32>
      %36 = arith.addi %35, %34 : vector<8x128xi32>
      %c128_i32_5 = arith.constant 128 : i32
      %37 = arith.muli %arg1, %c128_i32_5 : i32
      %38 = tpu.iota {dimensions = array<i32: 1>} : vector<8x128xi32>
      %39 = vector.broadcast %37 : i32 to vector<8x128xi32>
      %40 = arith.addi %39, %38 : vector<8x128xi32>
      %c0_6 = arith.constant 0 : index
      %c0_7 = arith.constant 0 : index
      %41 = vector.load %arg4[%c0_6, %c0_7] : memref<8x1xi32, #tpu.memory_space<vmem>>, vector<8x1xi32>
      %c0_8 = arith.constant 0 : index
      %c0_9 = arith.constant 0 : index
      %42 = vector.load %arg5[%c0_8, %c0_9] : memref<1x128xi32, #tpu.memory_space<vmem>>, vector<1x128xi32>
      %43 = vector.broadcast %41 : vector<8x1xi32> to vector<8x128xi32>
      %44 = vector.broadcast %42 : vector<1x128xi32> to vector<8x128xi32>
      %45 = arith.cmpi eq, %43, %44 : vector<8x128xi32>
      %46 = arith.cmpi slt, %36, %40 : vector<8x128xi32>
      %47 = arith.andi %46, %45 : vector<8x128xi1>
      %cst_10 = arith.constant 2.500000e+01 : f32
      %48 = vector.broadcast %cst_10 : f32 to vector<8x128xf32>
      %49 = arith.cmpf ole, %32, %48 : vector<8x128xf32>
      %50 = arith.andi %47, %49 : vector<8x128xi1>
      %c8_i32_11 = arith.constant 8 : i32
      %51 = vector.broadcast %c8_i32_11 : i32 to vector<8x128xi32>
      %52 = arith.cmpi slt, %36, %51 : vector<8x128xi32>
      %53 = arith.andi %50, %52 : vector<8x128xi1>
      %c8_i32_12 = arith.constant 8 : i32
      %54 = vector.broadcast %c8_i32_12 : i32 to vector<8x128xi32>
      %55 = arith.cmpi slt, %40, %54 : vector<8x128xi32>
      %56 = arith.andi %53, %55 : vector<8x128xi1>
      %57 = math.sqrt %32 : vector<8x128xf32>
      %cst_13 = arith.constant -1.000000e+00 : f32
      %58 = vector.broadcast %cst_13 : f32 to vector<8x128xf32>
      %59 = arith.select %56, %57, %58 : vector<8x128xi1>, vector<8x128xf32>
      %c0_14 = arith.constant 0 : index
      %c0_15 = arith.constant 0 : index
      %60 = vector.load %arg6[%c0_14, %c0_15] : memref<8x128xf32, #tpu.memory_space<vmem>>, vector<8x128xf32>
      tpu.vector_store %arg6[%c0_14, %c0_15], %59 {strides = array<i32>} : memref<8x128xf32, #tpu.memory_space<vmem>>, vector<8x128xf32>,
    } else {
    }
    return
  }
  func.func @transform_0(%arg0: i32, %arg1: i32) -> (i32, i32) {
    %c0_i32 = arith.constant 0 : i32
    %c0_i32_0 = arith.constant 0 : i32
    return %arg0, %c0_i32 : i32, i32
  }
  func.func @transform_1(%arg0: i32, %arg1: i32) -> (i32, i32) {
    %c0_i32 = arith.constant 0 : i32
    %c0_i32_0 = arith.constant 0 : i32
    return %c0_i32, %arg1 : i32, i32
  }
  func.func @transform_2(%arg0: i32, %arg1: i32) -> (i32, i32) {
    %c0_i32 = arith.constant 0 : i32
    %c0_i32_0 = arith.constant 0 : i32
    return %arg0, %c0_i32 : i32, i32
  }
  func.func @transform_3(%arg0: i32, %arg1: i32) -> (i32, i32) {
    %c0_i32 = arith.constant 0 : i32
    %c0_i32_0 = arith.constant 0 : i32
    return %c0_i32, %arg1 : i32, i32
  }
  func.func @transform_4(%arg0: i32, %arg1: i32) -> (i32, i32) {
    %c0_i32 = arith.constant 0 : i32
    return %arg0, %arg1 : i32, i32
  }
}

</mosaic_0001>

<llo_original>
// kernel: tpu_custom_call.1
$region0: #{tpu_custom_call.1}
  #allocation0 [shape = 'u32[]', space=smem, size = 0x4, offset = 0x4, fixed_abs, tag = 'smem constant byte address 0x4 - core index']
  #allocation1 [shape = 'u32[72,128]{1,0:T(1,128)}', space=vmem, size = 0x9000, scoped, tag = 'internal scratch']
  %s0 = inlined_call_operand.vmem [shape: f32[8,3], index: 0, kind: input, shape index: {}]
  %s1 = inlined_call_operand.vmem [shape: f32[3,128], index: 1, kind: input, shape index: {}]
  %s2 = inlined_call_operand.vmem [shape: s32[8,1], index: 2, kind: input, shape index: {}]
  %s3 = inlined_call_operand.vmem [shape: s32[1,128], index: 3, kind: input, shape index: {}]
  %s4 = inlined_call_operand.hbm [shape: f32[8,128], index: 4, kind: output, shape index: {}]
  %s5 = sld [smem:[#allocation0]]
  $region34: #{tpu_custom_call.1} parent=0
    _
  %s7 = ssub.s32 1, %s5
  %s8 = scalar_select 0, %s7, %s5
  $region1: #{tpu_custom_call.1} parent=0
    #allocation2 [shape = 'u8[4096]{0}', space=vmem, size = 0x1000, scoped, tag = 'output window, operand 0, single buffered']
    #allocation3 [shape = 's32[1]{0}', space=sflag, size = 0x4, scoped, tag = 'scoped memory for tpu_custom_call.1']
    %9 = vsyncpa [#allocation3], 0
    // Predicated region
    $region2: #{tpu_custom_call.1} parent=1 // pred_check
      _
    $region3: #{tpu_custom_call.1} parent=1 // pred_check_branch
      %11 = sbr.rel (0) target = $region5
    $region4: #{tpu_custom_call.1} parent=1 // pred_region
      _
    $region5: #{tpu_custom_call.1} parent=1 // pred_fallthru
      _
    // Predicated region
    $region6: #{tpu_custom_call.1} parent=1 // pred_check
      _
    $region7: #{tpu_custom_call.1} parent=1 // pred_check_branch
      %13 = sbr.rel (0) target = $region9
    $region8: #{tpu_custom_call.1} parent=1 // pred_region
      _
    $region9: #{tpu_custom_call.1} parent=1 // pred_fallthru
      _
    // Predicated region
    $region10: #{tpu_custom_call.1} parent=1 // pred_check
      _
    $region11: #{tpu_custom_call.1} parent=1 // pred_check_branch
      %15 = sbr.rel (0) target = $region13
    $region12: #{tpu_custom_call.1} parent=1 // pred_region
      _
    $region13: #{tpu_custom_call.1} parent=1 // pred_fallthru
      _
    // Predicated region
    $region14: #{tpu_custom_call.1} parent=1 // pred_check
      _
    $region15: #{tpu_custom_call.1} parent=1 // pred_check_branch
      %17 = sbr.rel (0) target = $region17
    $region16: #{tpu_custom_call.1} parent=1 // pred_region
      _
    $region17: #{tpu_custom_call.1} parent=1 // pred_fallthru
      _
    %s18 = smul.u32 0, 8
    %s19 = sadd.s32 0, 1
    %s20 = smul.u32 %s19, 128
    %p21 = scmp.ge.s32.totalorder %s18, %s20
    // Predicated region
    $region18: #{tpu_custom_call.1} parent=1 // pred_check
      %p22 = pneg %p21
    $region19: #{tpu_custom_call.1} parent=1 // pred_check_branch
      %24 = sbr.rel (%p22) target = $region21
    $region20: #{tpu_custom_call.1} parent=1 // pred_region
      %25 = vst [vmem:[#allocation2] sm:$0xff] -1.0
    $region21: #{tpu_custom_call.1} parent=1 // pred_fallthru
      _
    %p26 = scmp.lt.s32.totalorder %s18, %s20
    // Predicated region
    $region22: #{tpu_custom_call.1} parent=1 // pred_check
      %p27 = pneg %p26
    $region23: #{tpu_custom_call.1} parent=1 // pred_check_branch
      %29 = sbr.rel (%p27) target = $region25
    $region24: #{tpu_custom_call.1} parent=1 // pred_region
      %v30 = vld [vmem:[%s0] sm:$0xff]
      %v31 = vld [vmem:[%s1] sm:$0x7]
      %33 = vset.pattern.permute.xlu0 0
      %34 = vperm.xlu0 %33, %v30
      %v35 = vpop.permute.xlu0 %34
      %v37 = vperm.slane %v31, 0
      %v38 = vsub.f32 %v35, %v37
      %v39 = vmul.f32 %v38, %v38
      %v40 = vadd.f32 %v39, 0.0
      %41 = vset.pattern.permute.xlu0 1
      %42 = vperm.xlu0 %41, %v30
      %v43 = vpop.permute.xlu0 %42
      %v45 = vperm.slane %v31, 1
      %v46 = vsub.f32 %v43, %v45
      %v47 = vmul.f32 %v46, %v46
      %v48 = vadd.f32 %v40, %v47
      %49 = vset.pattern.permute.xlu0 2
      %50 = vperm.xlu0 %49, %v30
      %v51 = vpop.permute.xlu0 %50
      %v53 = vperm.slane %v31, 2
      %v54 = vsub.f32 %v51, %v53
      %v55 = vmul.f32 %v54, %v54
      %v56 = vadd.f32 %v48, %v55
      %v57 = vlaneseq
      %v58 = vshrl.u32 %v57, 7
      %v59 = vstv %s18
      %v60 = vadd.s32 %v59, %v58
      %s61 = smul.u32 0, 128
      %v62 = vlaneseq
      %v63 = vand.u32 %v62, 127
      %v64 = vstv %s61
      %v65 = vadd.s32 %v64, %v63
      %v66 = vld [vmem:[%s2] sm:$0xff]
      %v67 = vld [vmem:[%s3] sm:$0x1]
      %68 = vset.pattern.permute.xlu0 0
      %69 = vperm.xlu0 %68, %v66
      %v70 = vpop.permute.xlu0 %69
      %v71 = vperm.slane %v67, 0
      %vm72 = vcmp.eq.s32.totalorder %v70, %v71
      %vm73 = vcmp.lt.s32.totalorder %v60, %v65
      %vm74 = vmand %vm73, %vm72
      %vm75 = vcmp.le.f32.partialorder %v56, 25.0
      %vm76 = vmand %vm74, %vm75
      %vm77 = vcmp.lt.s32.totalorder %v60, 8
      %vm78 = vmand %vm76, %vm77
      %vm79 = vcmp.lt.s32.totalorder %v65, 8
      %vm80 = vmand %vm78, %vm79
      %v81 = vrsqrt.pop %v56
      %v82 = vmul.f32 %v81, %v56
      %v83 = vmul.f32 %v82, %v81
      %v84 = vmul.f32 0.5, %v83
      %v85 = vsub.f32 1.5, %v84
      %v86 = vmul.f32 %v81, %v85
      %v87 = vmul.f32 %v56, %v86
      %vm88 = vcmp.eq.f32.partialorder %v56, inf
      %v89 = vsel %vm88, %v56, %v87
      %vm90 = vcmp.eq.f32.partialorder %v56, 0.0
      %v91 = vand.u32 %v56, 2147483648
      %v92 = vsel %vm90, %v91, %v89
      %v93 = vsel %vm80, %v92, -1.0
      %94 = vst [vmem:[#allocation2] sm:$0xff] %v93
    $region25: #{tpu_custom_call.1} parent=1 // pred_fallthru
      _
    // Predicated region
    $region26: #{tpu_custom_call.1} parent=1 // pred_check
      _
    $region27: #{tpu_custom_call.1} parent=1 // pred_check_branch
      %96 = sbr.rel (0) target = $region29
    $region28: #{tpu_custom_call.1} parent=1 // pred_region
      %98 = vsyncadd [#allocation3], 0
      %s100 = sshll.u32 [#allocation2], 4
      %s101 = int_to_ptr.vmem [resolvable:$true] %s100
      %s102 = sshll.u32 %s4, 4
      %s103 = int_to_ptr.hbm [resolvable:$true] %s102
      %105 = dma.vmem_to_hbm [thread:$0]  %s101, 128, %s103, [#allocation3]
    $region29: #{tpu_custom_call.1} parent=1 // pred_fallthru
      _
    // Predicated region
    $region30: #{tpu_custom_call.1} parent=1 // pred_check
      _
    $region31: #{tpu_custom_call.1} parent=1 // pred_check_branch
      %107 = sbr.rel (0) target = $region33
    $region32: #{tpu_custom_call.1} parent=1 // pred_region
      %109 = dma.done [#allocation3], 128
    $region33: #{tpu_custom_call.1} parent=1 // pred_fallthru
      _
    %110 = vsyncpa [#allocation3], 1

</llo_original>
